<compile_context>
chip_gen: v7x
topology: tpu7x:2x2x1
jax: 0.10.0
libtpu: 0.0.40
codegen_flags: <defaults>
</compile_context>

<pallas_src>
import functools

import jax
import jax.numpy as jnp
from jax import lax
from jax.experimental import pallas as pl
from jax.experimental.pallas import tpu as pltpu


def _round_up(x, m):
    return (x + m - 1) // m * m


def _largest_divisor_leq(n, cap):
    for d in range(max(1, min(n, cap)), 0, -1):
        if n % d == 0:
            return d
    return 1


def _fft_conv1d_kernel(*refs, kernel_size, stride, dilation, halo, b_tile):
    """One (batch-tile, group, L-tile) grid step.

    refs (halo > 0):  x_ref, xh_ref, w_ref, b_ref, o_ref
    refs (halo == 0): x_ref,          w_ref, b_ref, o_ref

    x_ref : (b_tile, cin_g, w_in)        current input tile (w_in = TL*stride)
    xh_ref: (b_tile, cin_g, halo_block)  narrow halo block from the next tile
    w_ref : (cout_g, K*cin_g)            pre-flattened weight (k-major, c-minor)
    b_ref : (cout_g, 1)                  bias, f32
    o_ref : (b_tile, cout_g, TL)         output tile (TL is a multiple of 128)
    """
    if halo > 0:
        x_ref, xh_ref, w_ref, b_ref, o_ref = refs
    else:
        x_ref, w_ref, b_ref, o_ref = refs
        xh_ref = None

    tl = o_ref.shape[-1]
    w = w_ref[...]                      # resident weight, reused for all b
    bias = b_ref[...]                   # (cout_g, 1) f32

    x_cur = x_ref[...]                  # (b_tile, cin_g, w_in)
    if halo > 0:
        # Append only the (128-aligned) halo block — not a full second tile.
        window = jnp.concatenate([x_cur, xh_ref[...]], axis=-1)
    else:
        window = x_cur

    # im2col: K shifted views stacked on the channel (sublane) axis so the K
    # per-tap matmuls collapse into a single deep contraction per sample.
    parts = []
    for k in range(kernel_size):
        start = k * dilation
        if stride == 1:
            parts.append(window[:, :, start:start + tl])
        else:
            # TODO(synk): phase-decompose the input for stride>1 so every tap
            # read is a contiguous lane slice; this strided slice is correct
            # but relayout-heavy.
            parts.append(
                window[:, :, start:start + (tl - 1) * stride + 1:stride])
    col = parts[0] if kernel_size == 1 else jnp.concatenate(parts, axis=1)

    # One MXU matmul per batch sample; weight stays resident across the loop.
    for b in range(b_tile):
        acc = jnp.dot(w, col[b], preferred_element_type=jnp.float32)
        o_ref[b] = (acc + bias).astype(o_ref.dtype)


def fft_conv1d_pallas(signal, weight, bias=None, *, padding=0, stride=1,
                      dilation=1, groups=1, bit=8, lt_tile=2048, batch_tile=8,
                      compute_dtype=None):
    """Equivalent of _FFTConv(ndim=1).forward(signal).

    compute_dtype: optionally cast the matmul operands (e.g. jnp.bfloat16 on
    v6e/v7x — halves HBM/VMEM bytes, native MXU dtype) while accumulating in
    f32; defaults to the input dtype (f32 here, for exact parity checks).
    """
    # TODO(synk): the reference module's Quant(bit) weight quantizer class is
    # not defined in the provided source; treated as identity here.  If it
    # becomes int8 weights, dequantize to bf16 before the MXU on v7x (fp8-only
    # MXU); int8 MXU operands are fine on v5e/v6e.
    n, c_in, length = signal.shape
    c_out, cin_g, k = weight.shape
    assert c_in % groups == 0 and c_out % groups == 0
    assert cin_g == c_in // groups
    cout_g = c_out // groups
    if bias is None:
        bias = jnp.zeros((c_out,), jnp.float32)

    eff_k = dilation * (k - 1) + 1
    l_out = (length + 2 * padding - eff_k) // stride + 1
    assert l_out > 0

    halo = dilation * (k - 1)
    halo_block = _round_up(halo, 128) if halo > 0 else 0
    align = halo_block if halo > 0 else 128   # TL must divide by this

    in_itemsize = jnp.dtype(compute_dtype or signal.dtype).itemsize
    out_itemsize = jnp.dtype(signal.dtype).itemsize

    # ---- VMEM budget, re-derived per generation (v7x: 64 MiB/TC). ----
    try:
        vmem_cap = getattr(pltpu.get_tpu_info(), "vmem_capacity_bytes", None)
    except Exception:
        vmem_cap = None
    if not vmem_cap:
        vmem_cap = 64 * 1024 * 1024            # conservative (v7x) fallback
    vmem_limit = min(int(vmem_cap) * 3 // 4, 96 * 1024 * 1024)
    budget = int(vmem_limit * 0.8)

    def step_bytes(b_t, tl_):
        w_in_ = tl_ * stride
        x_blk = b_t * cin_g * w_in_ * in_itemsize
        h_blk = b_t * cin_g * halo_block * in_itemsize
        o_blk = b_t * cout_g * tl_ * out_itemsize
        w_blk = cout_g * k * cin_g * in_itemsize
        tmp = (b_t * cin_g * (w_in_ + halo_block) * 4   # window
               + b_t * k * cin_g * tl_ * 4              # im2col
               + cout_g * tl_ * 4)                      # f32 accumulator
        return 2 * (x_blk + h_blk + o_blk) + 2 * w_blk + tmp

    # ---- tile selection: lane-dense, fat, inside the VMEM budget. ----
    tl = max(align, _round_up(max(lt_tile, 128), align))
    tl = min(tl, _round_up(l_out, align))
    b_tile = _largest_divisor_leq(n, max(1, batch_tile))
    while step_bytes(b_tile, tl) > budget and (tl > align or b_tile > 1):
        if tl > align:
            tl = max(align, _round_up(tl // 2, align))
        else:
            b_tile = _largest_divisor_leq(n, b_tile - 1)
    n_lt = pl.cdiv(l_out, tl)
    # Re-balance so the padded tail waste stays small even with fat tiles.
    tl = max(align, _round_up(pl.cdiv(l_out, n_lt), align))
    n_lt = pl.cdiv(l_out, tl)
    l_out_pad = n_lt * tl
    w_in = tl * stride                         # input columns per output tile
    assert w_in % 128 == 0
    if halo > 0:
        assert w_in % halo_block == 0

    # ---- one zero-pad: conv padding + tile alignment + one trailing halo
    #      block (no longer a full extra w_in tile).
    # TODO(synk): handling this padding inside the kernel (masked first/last
    # tiles) would remove one full-signal HBM round trip for long signals.
    l_x = max(n_lt * w_in + halo_block, length + padding)
    pad_right = l_x - length - padding
    assert pad_right >= 0
    x4 = signal.reshape(n, groups, cin_g, length)
    x4 = jnp.pad(x4, ((0, 0), (0, 0), (0, 0), (padding, pad_right)))

    # Weight pre-flattened (k-major, c-minor): (groups, cout_g, K*cin_g).
    w3 = jnp.transpose(weight, (0, 2, 1)).reshape(groups, cout_g, k * cin_g)
    b3 = bias.reshape(groups, cout_g, 1).astype(jnp.float32)

    if compute_dtype is not None:
        x4 = x4.astype(compute_dtype)
        w3 = w3.astype(compute_dtype)

    kern = functools.partial(_fft_conv1d_kernel, kernel_size=k, stride=stride,
                             dilation=dilation, halo=halo, b_tile=b_tile)

    in_specs = [
        # current input tile (batch-tiled)
        pl.BlockSpec((b_tile, None, cin_g, w_in),
                     lambda bt, g, t: (bt, g, 0, t)),
    ]
    operands = [x4]
    if halo > 0:
        hb = w_in // halo_block   # element offset (t+1)*w_in in halo_block units
        in_specs.append(
            pl.BlockSpec((b_tile, None, cin_g, halo_block),
                         lambda bt, g, t: (bt, g, 0, (t + 1) * hb)))
        operands.append(x4)       # second narrow view of the same array
    in_specs += [
        # per-group flattened weight
        pl.BlockSpec((None, cout_g, k * cin_g), lambda bt, g, t: (g, 0, 0)),
        # per-group bias
        pl.BlockSpec((None, cout_g, 1), lambda bt, g, t: (g, 0, 0)),
    ]
    operands += [w3, b3]

    out4 = pl.pallas_call(
        kern,
        out_shape=jax.ShapeDtypeStruct((n, groups, cout_g, l_out_pad),
                                       signal.dtype),
        grid=(n // b_tile, groups, n_lt),
        in_specs=in_specs,
        out_specs=pl.BlockSpec((b_tile, None, cout_g, tl),
                               lambda bt, g, t: (bt, g, 0, t)),
        compiler_params=pltpu.CompilerParams(
            dimension_semantics=("parallel", "parallel", "parallel"),
            vmem_limit_bytes=vmem_limit),
    )(*operands)

    out = out4.reshape(n, c_out, l_out_pad)[:, :, :l_out]
    return out


def _reference_conv1d(signal, weight, bias, *, padding, stride, dilation, groups):
    out = lax.conv_general_dilated(
        signal, weight,
        window_strides=(stride,),
        padding=[(padding, padding)],
        rhs_dilation=(dilation,),
        dimension_numbers=("NCH", "OIH", "NCH"),
        feature_group_count=groups,
    )
    return out + bias.reshape(1, -1, 1)


if __name__ == "__main__":
    # module config: _FFTConv(in_channels=4, out_channels=8, kernel_size=3,
    #                         bit=8, padding=1, stride=1, dilation=1,
    #                         groups=1, bias=True, ndim=1)
    key = jax.random.PRNGKey(0)
    configs = [
        dict(batch=2, in_ch=4, out_ch=8, ksize=3, length=16,
             padding=1, stride=1, dilation=1, groups=1),
        # exercise the grouped + dilated (halo) path
        dict(batch=2, in_ch=4, out_ch=8, ksize=3, length=16,
             padding=2, stride=1, dilation=2, groups=2),
    ]

    for cfg in configs:
        key, k_sig, k_w, k_b = jax.random.split(key, 4)
        signal = jax.random.normal(
            k_sig, (cfg["batch"], cfg["in_ch"], cfg["length"]), jnp.float32)
        weight = jax.random.normal(
            k_w, (cfg["out_ch"], cfg["in_ch"] // cfg["groups"], cfg["ksize"]),
            jnp.float32)
        bias = jax.random.normal(k_b, (cfg["out_ch"],), jnp.float32)

        out = fft_conv1d_pallas(signal, weight, bias,
                                padding=cfg["padding"], stride=cfg["stride"],
                                dilation=cfg["dilation"], groups=cfg["groups"],
                                bit=8)
        out = jax.block_until_ready(out)

        ref = _reference_conv1d(signal, weight, bias,
                                padding=cfg["padding"], stride=cfg["stride"],
                                dilation=cfg["dilation"], groups=cfg["groups"])
        assert out.shape == ref.shape, (out.shape, ref.shape)
        err = float(jnp.max(jnp.abs(out - ref)))
        assert err < 1e-3, err

    print("KERNEL_OK")
</pallas_src>

<mosaic_0001>
module attributes {stable_mosaic.version = 11 : i64} {
  func.func @_fft_conv1d_kernel(%arg0: i32, %arg1: i32, %arg2: i32, %arg3: memref<2x1x4x128xf32, #tpu.memory_space<vmem>>, %arg4: memref<2x1x4x128xf32, #tpu.memory_space<vmem>>, %arg5: memref<1x8x12xf32, #tpu.memory_space<vmem>>, %arg6: memref<1x8x1xf32, #tpu.memory_space<vmem>>, %arg7: memref<2x1x8x128xf32, #tpu.memory_space<vmem>>) attributes {dimension_semantics = [#tpu.dimension_semantics<parallel>, #tpu.dimension_semantics<parallel>, #tpu.dimension_semantics<parallel>], iteration_bounds = array<i64: 1, 1, 1>, scalar_prefetch = 0 : i64, scratch_operands = 0 : i64, tpu.core_type = #tpu.core_type<tc>, window_params = [{transform_indices = @transform_0, window_bounds = array<i64: 2, 1, 4, 128>}, {transform_indices = @transform_1, window_bounds = array<i64: 2, 1, 4, 128>}, {transform_indices = @transform_2, window_bounds = array<i64: 1, 8, 12>}, {transform_indices = @transform_3, window_bounds = array<i64: 1, 8, 1>}, {transform_indices = @transform_4, window_bounds = array<i64: 2, 1, 8, 128>}]} {
    %c0 = arith.constant 0 : index
    %c0_0 = arith.constant 0 : index
    %c0_1 = arith.constant 0 : index
    %0 = vector.load %arg5[%c0, %c0_0, %c0_1] : memref<1x8x12xf32, #tpu.memory_space<vmem>>, vector<1x8x12xf32>
    %1 = vector.shape_cast %0 : vector<1x8x12xf32> to vector<8x12xf32>
    %c0_2 = arith.constant 0 : index
    %c0_3 = arith.constant 0 : index
    %c0_4 = arith.constant 0 : index
    %2 = vector.load %arg6[%c0_2, %c0_3, %c0_4] : memref<1x8x1xf32, #tpu.memory_space<vmem>>, vector<1x8x1xf32>
    %3 = vector.shape_cast %2 : vector<1x8x1xf32> to vector<8x1xf32>
    %c0_5 = arith.constant 0 : index
    %c0_6 = arith.constant 0 : index
    %c0_7 = arith.constant 0 : index
    %c0_8 = arith.constant 0 : index
    %4 = vector.load %arg3[%c0_5, %c0_6, %c0_7, %c0_8] : memref<2x1x4x128xf32, #tpu.memory_space<vmem>>, vector<2x1x4x128xf32>
    %5 = vector.shape_cast %4 : vector<2x1x4x128xf32> to vector<2x4x128xf32>
    %c0_9 = arith.constant 0 : index
    %c0_10 = arith.constant 0 : index
    %c0_11 = arith.constant 0 : index
    %c0_12 = arith.constant 0 : index
    %6 = vector.load %arg4[%c0_9, %c0_10, %c0_11, %c0_12] : memref<2x1x4x128xf32, #tpu.memory_space<vmem>>, vector<2x1x4x128xf32>
    %7 = vector.shape_cast %6 : vector<2x1x4x128xf32> to vector<2x4x128xf32>
    %8 = tpu.concatenate %5, %7 in 2 : vector<2x4x128xf32>, vector<2x4x128xf32> -> vector<2x4x256xf32>
    %9 = vector.extract_strided_slice %8 {offsets = [0, 0, 0], sizes = [2, 4, 128], strides = [1, 1, 1]} : vector<2x4x256xf32> to vector<2x4x128xf32>
    %10 = vector.extract_strided_slice %8 {offsets = [0, 0, 1], sizes = [2, 4, 128], strides = [1, 1, 1]} : vector<2x4x256xf32> to vector<2x4x128xf32>
    %11 = vector.extract_strided_slice %8 {offsets = [0, 0, 2], sizes = [2, 4, 128], strides = [1, 1, 1]} : vector<2x4x256xf32> to vector<2x4x128xf32>
    %12 = tpu.concatenate %9, %10, %11 in 1 : vector<2x4x128xf32>, vector<2x4x128xf32>, vector<2x4x128xf32> -> vector<2x12x128xf32>
    %13 = vector.extract_strided_slice %12 {offsets = [0, 0, 0], sizes = [1, 12, 128], strides = [1, 1, 1]} : vector<2x12x128xf32> to vector<1x12x128xf32>
    %14 = vector.shape_cast %13 : vector<1x12x128xf32> to vector<12x128xf32>
    %cst = arith.constant dense<0.000000e+00> : vector<8x128xf32>
    %15 = tpu.matmul %1, %14, %cst {dimension_numbers = #tpu.dot_dimension_numbers<[1], [0], [0], [1], [0, 0, 1, 1], [], []>} : vector<8x12xf32>, vector<12x128xf32>, vector<8x128xf32> -> vector<8x128xf32>
    %16 = vector.broadcast %3 : vector<8x1xf32> to vector<8x128xf32>
    %17 = arith.addf %15, %16 : vector<8x128xf32>
    %c0_13 = arith.constant 0 : index
    %c0_14 = arith.constant 0 : index
    %c0_15 = arith.constant 0 : index
    %c0_16 = arith.constant 0 : index
    %18 = vector.load %arg7[%c0_13, %c0_14, %c0_15, %c0_16] : memref<2x1x8x128xf32, #tpu.memory_space<vmem>>, vector<1x1x8x128xf32>
    %19 = vector.shape_cast %18 : vector<1x1x8x128xf32> to vector<8x128xf32>
    %20 = vector.shape_cast %17 : vector<8x128xf32> to vector<1x1x8x128xf32>
    tpu.vector_store %arg7[%c0_13, %c0_14, %c0_15, %c0_16], %20 {strides = array<i32>} : memref<2x1x8x128xf32, #tpu.memory_space<vmem>>, vector<1x1x8x128xf32>,
    %21 = vector.extract_strided_slice %12 {offsets = [1, 0, 0], sizes = [1, 12, 128], strides = [1, 1, 1]} : vector<2x12x128xf32> to vector<1x12x128xf32>
    %22 = vector.shape_cast %21 : vector<1x12x128xf32> to vector<12x128xf32>
    %cst_17 = arith.constant dense<0.000000e+00> : vector<8x128xf32>
    %23 = tpu.matmul %1, %22, %cst_17 {dimension_numbers = #tpu.dot_dimension_numbers<[1], [0], [0], [1], [0, 0, 1, 1], [], []>} : vector<8x12xf32>, vector<12x128xf32>, vector<8x128xf32> -> vector<8x128xf32>
    %24 = vector.broadcast %3 : vector<8x1xf32> to vector<8x128xf32>
    %25 = arith.addf %23, %24 : vector<8x128xf32>
    %c1 = arith.constant 1 : index
    %c0_18 = arith.constant 0 : index
    %c0_19 = arith.constant 0 : index
    %c0_20 = arith.constant 0 : index
    %26 = vector.load %arg7[%c1, %c0_18, %c0_19, %c0_20] : memref<2x1x8x128xf32, #tpu.memory_space<vmem>>, vector<1x1x8x128xf32>
    %27 = vector.shape_cast %26 : vector<1x1x8x128xf32> to vector<8x128xf32>
    %28 = vector.shape_cast %25 : vector<8x128xf32> to vector<1x1x8x128xf32>
    tpu.vector_store %arg7[%c1, %c0_18, %c0_19, %c0_20], %28 {strides = array<i32>} : memref<2x1x8x128xf32, #tpu.memory_space<vmem>>, vector<1x1x8x128xf32>,
    return
  }
  func.func @transform_0(%arg0: i32, %arg1: i32, %arg2: i32) -> (i32, i32, i32, i32) {
    %c0_i32 = arith.constant 0 : i32
    %c0_i32_0 = arith.constant 0 : i32
    return %arg0, %arg1, %c0_i32, %arg2 : i32, i32, i32, i32
  }
  func.func @transform_1(%arg0: i32, %arg1: i32, %arg2: i32) -> (i32, i32, i32, i32) {
    %c1_i32 = arith.constant 1 : i32
    %0 = arith.addi %arg2, %c1_i32 : i32
    %c1_i32_0 = arith.constant 1 : i32
    %1 = arith.muli %0, %c1_i32_0 : i32
    %c0_i32 = arith.constant 0 : i32
    %c0_i32_1 = arith.constant 0 : i32
    return %arg0, %arg1, %c0_i32, %1 : i32, i32, i32, i32
  }
  func.func @transform_2(%arg0: i32, %arg1: i32, %arg2: i32) -> (i32, i32, i32) {
    %c0_i32 = arith.constant 0 : i32
    %c0_i32_0 = arith.constant 0 : i32
    %c0_i32_1 = arith.constant 0 : i32
    return %arg1, %c0_i32, %c0_i32_0 : i32, i32, i32
  }
  func.func @transform_3(%arg0: i32, %arg1: i32, %arg2: i32) -> (i32, i32, i32) {
    %c0_i32 = arith.constant 0 : i32
    %c0_i32_0 = arith.constant 0 : i32
    %c0_i32_1 = arith.constant 0 : i32
    return %arg1, %c0_i32, %c0_i32_0 : i32, i32, i32
  }
  func.func @transform_4(%arg0: i32, %arg1: i32, %arg2: i32) -> (i32, i32, i32, i32) {
    %c0_i32 = arith.constant 0 : i32
    %c0_i32_0 = arith.constant 0 : i32
    return %arg0, %arg1, %c0_i32, %arg2 : i32, i32, i32, i32
  }
}

</mosaic_0001>

<llo_original>
// kernel: tpu_custom_call.1
$region0: #{tpu_custom_call.1}
  #allocation0 [shape = 'u32[]', space=smem, size = 0x4, offset = 0x4, fixed_abs, tag = 'smem constant byte address 0x4 - core index']
  #allocation1 [shape = 'u32[144,128]{1,0:T(1,128)}', space=vmem, size = 0x12000, scoped, tag = 'internal scratch']
  %s0 = inlined_call_operand.hbm [shape: f32[2,1,4,256], index: 0, kind: input, shape index: {}]
  %s1 = inlined_call_operand.hbm [shape: f32[2,1,4,256], index: 1, kind: input, shape index: {}]
  %s2 = inlined_call_operand.vmem [shape: f32[1,8,12], index: 2, kind: input, shape index: {}]
  %s3 = inlined_call_operand.vmem [shape: f32[1,8,1], index: 3, kind: input, shape index: {}]
  %s4 = inlined_call_operand.hbm [shape: f32[2,1,8,128], index: 4, kind: output, shape index: {}]
  %s5 = sld [smem:[#allocation0]]
  $region34: #{tpu_custom_call.1} parent=0
    _
  %s7 = ssub.s32 1, %s5
  %s8 = scalar_select 0, %s7, %s5
  $region1: #{tpu_custom_call.1} parent=0
    #allocation2 [shape = 'u8[4096]{0}', space=vmem, size = 0x1000, scoped, tag = 'input window, operand 0, single buffered']
    #allocation3 [shape = 's32[1]{0}', space=sflag, size = 0x4, scoped, tag = 'scoped memory for tpu_custom_call.1']
    #allocation4 [shape = 's32[1]{0}', space=sflag, size = 0x4, scoped, tag = 'scoped memory for tpu_custom_call.1']
    #allocation5 [shape = 'u8[4096]{0}', space=vmem, size = 0x1000, scoped, tag = 'input window, operand 1, single buffered']
    #allocation6 [shape = 's32[1]{0}', space=sflag, size = 0x4, scoped, tag = 'scoped memory for tpu_custom_call.1']
    #allocation7 [shape = 'u8[8192]{0}', space=vmem, size = 0x2000, scoped, tag = 'output window, operand 0, single buffered']
    %9 = vsyncpa [#allocation3], 0
    %10 = vsyncpa [#allocation6], 0
    %11 = vsyncpa [#allocation4], 0
    // Predicated region
    $region2: #{tpu_custom_call.1} parent=1 // pred_check
      _
    $region3: #{tpu_custom_call.1} parent=1 // pred_check_branch
      %13 = sbr.rel (0) target = $region5
    $region4: #{tpu_custom_call.1} parent=1 // pred_region
      %s15 = ssub.s32 128, 128
      %16 = vsyncadd [#allocation3], %s15
      %s17 = sshll.u32 [#allocation2], 4
      %s18 = int_to_ptr.vmem [resolvable:$true] %s17
      %23 = dma.hbm_to_vmem [thread:$0]  %s0, 128, %s18, [#allocation3], 128, 64, 4
    $region5: #{tpu_custom_call.1} parent=1 // pred_fallthru
      _
    // Predicated region
    $region6: #{tpu_custom_call.1} parent=1 // pred_check
      _
    $region7: #{tpu_custom_call.1} parent=1 // pred_check_branch
      %25 = sbr.rel (0) target = $region9
    $region8: #{tpu_custom_call.1} parent=1 // pred_region
      %s26 = sadd.s32 0, 1
      %s28 = ssub.s32 128, 128
      %29 = vsyncadd [#allocation6], %s28
      %s30 = smul.addr %s26, 64
      %s31 = scalar_lea.hbm %s1, %s30
      %s32 = sshll.u32 [#allocation5], 4
      %s33 = int_to_ptr.vmem [resolvable:$true] %s32
      %38 = dma.hbm_to_vmem [thread:$0]  %s31, 128, %s33, [#allocation6], 128, 64, 4
    $region9: #{tpu_custom_call.1} parent=1 // pred_fallthru
      _
    // Predicated region
    $region10: #{tpu_custom_call.1} parent=1 // pred_check
      _
    $region11: #{tpu_custom_call.1} parent=1 // pred_check_branch
      %40 = sbr.rel (0) target = $region13
    $region12: #{tpu_custom_call.1} parent=1 // pred_region
      _
    $region13: #{tpu_custom_call.1} parent=1 // pred_fallthru
      _
    // Predicated region
    $region14: #{tpu_custom_call.1} parent=1 // pred_check
      _
    $region15: #{tpu_custom_call.1} parent=1 // pred_check_branch
      %42 = sbr.rel (0) target = $region17
    $region16: #{tpu_custom_call.1} parent=1 // pred_region
      _
    $region17: #{tpu_custom_call.1} parent=1 // pred_fallthru
      _
    // Predicated region
    $region18: #{tpu_custom_call.1} parent=1 // pred_check
      _
    $region19: #{tpu_custom_call.1} parent=1 // pred_check_branch
      %44 = sbr.rel (0) target = $region21
    $region20: #{tpu_custom_call.1} parent=1 // pred_region
      %45 = dma.done [#allocation3], 128
    $region21: #{tpu_custom_call.1} parent=1 // pred_fallthru
      _
    // Predicated region
    $region22: #{tpu_custom_call.1} parent=1 // pred_check
      _
    $region23: #{tpu_custom_call.1} parent=1 // pred_check_branch
      %47 = sbr.rel (0) target = $region25
    $region24: #{tpu_custom_call.1} parent=1 // pred_region
      %48 = dma.done [#allocation6], 128
    $region25: #{tpu_custom_call.1} parent=1 // pred_fallthru
      _
    %s49 = sadd.s32 0, 1
    %v50 = vld [vmem:[%s2] sm:$0xff]
    %v51 = vld [vmem:[%s3] sm:$0xff]
    %v52 = vld [vmem:[#allocation2] sm:$0xf]
    %v53 = vld [vmem:[#allocation2 + $0x4] sm:$0xf]
    %v54 = vld [vmem:[#allocation5] sm:$0xf]
    %v55 = vld [vmem:[#allocation5 + $0x4] sm:$0xf]
    %v60 = vrot.slane %v52, 4
    %v61 = vrot.slane %v54, 4
    %v62 = vrot.slane %v53, 4
    %v63 = vrot.slane %v55, 4
    %64 = vrot.lane.b32.xlu0 %v60, 127
    %v65 = vpop.permute.xlu0 %64
    %66 = vrot.lane.b32.xlu0 %v61, 127
    %v67 = vpop.permute.xlu0 %66
    %68 = vrot.lane.b32.xlu0 %v62, 127
    %v69 = vpop.permute.xlu0 %68
    %70 = vrot.lane.b32.xlu0 %v63, 127
    %v71 = vpop.permute.xlu0 %70
    %vm72 = vcmask 1039360
    %v73 = vsel %vm72, %v65, %v67
    %v74 = vsel %vm72, %v69, %v71
    %77 = vrot.lane.b32.xlu0 %v52, 126
    %v78 = vpop.permute.xlu0 %77
    %79 = vrot.lane.b32.xlu0 %v54, 126
    %v80 = vpop.permute.xlu0 %79
    %81 = vrot.lane.b32.xlu0 %v53, 126
    %v82 = vpop.permute.xlu0 %81
    %83 = vrot.lane.b32.xlu0 %v55, 126
    %v84 = vpop.permute.xlu0 %83
    %vm85 = vcmask 1031168
    %v86 = vsel %vm85, %v78, %v80
    %v87 = vsel %vm85, %v82, %v84
    %vm88 = vcmask 1043456
    %v89 = vsel %vm88, %v52, %v73
    %v90 = vsel %vm88, %v53, %v74
    %92 = vset.pattern.permute.xlu0 0
    %93 = vperm.xlu0 %92, %v51
    %v94 = vpop.permute.xlu0 %93
    %vm96 = vcmask 97280
    %v98 = vsel %vm96, %v50, 0
    %v100 = vsel %vm88, %v86, 0
    %102 = vmatprep.subr.mxu0 0.0
    %103 = vmatpush1.msra.mxu0 %v89
    %104 = vmatprep.subr.mxu0 0.0
    %105 = vmatpush1.msra.mxu0 %v100
    %106 = vmatprep.subr.mxu0 0.0
    %107 = vmatpush1.msra.mxu0 0.0
    %108 = vmatprep.subr.mxu0 0.0
    %109 = vmatpush1.msra.mxu0 0.0
    %110 = vmatprep.subr.mxu0 0.0
    %111 = vmatpush1.msra.mxu0 0.0
    %112 = vmatprep.subr.mxu0 0.0
    %113 = vmatpush1.msra.mxu0 0.0
    %114 = vmatprep.subr.mxu0 0.0
    %115 = vmatpush1.msra.mxu0 0.0
    %116 = vmatprep.subr.mxu0 0.0
    %117 = vmatpush1.msra.mxu0 0.0
    %118 = vmatprep.subr.mxu0 0.0
    %119 = vmatpush1.msra.mxu0 0.0
    %120 = vmatprep.subr.mxu0 0.0
    %121 = vmatpush1.msra.mxu0 0.0
    %122 = vmatprep.subr.mxu0 0.0
    %123 = vmatpush1.msra.mxu0 0.0
    %124 = vmatprep.subr.mxu0 0.0
    %125 = vmatpush1.msra.mxu0 0.0
    %126 = vmatprep.subr.mxu0 0.0
    %127 = vmatpush1.msra.mxu0 0.0
    %128 = vmatprep.subr.mxu0 0.0
    %129 = vmatpush1.msra.mxu0 0.0
    %130 = vmatprep.subr.mxu0 0.0
    %131 = vmatpush1.msra.mxu0 0.0
    %132 = vmatprep.subr.mxu0 0.0
    %133 = vmatpush1.msra.mxu0 0.0
    %134 = vmatprep.subr.mxu0 0.0
    %135 = vmatpush1.msra.mxu0 0.0
    %136 = vmatprep.subr.mxu0 0.0
    %137 = vmatpush1.msra.mxu0 0.0
    %138 = vmatprep.subr.mxu0 0.0
    %139 = vmatpush1.msra.mxu0 0.0
    %140 = vmatprep.subr.mxu0 0.0
    %141 = vmatpush1.msra.mxu0 0.0
    %142 = vmatprep.subr.mxu0 0.0
    %143 = vmatpush1.msra.mxu0 0.0
    %144 = vmatprep.subr.mxu0 0.0
    %145 = vmatpush1.msra.mxu0 0.0
    %146 = vmatprep.subr.mxu0 0.0
    %147 = vmatpush1.msra.mxu0 0.0
    %148 = vmatprep.subr.mxu0 0.0
    %149 = vmatpush1.msra.mxu0 0.0
    %150 = vmatprep.subr.mxu0 0.0
    %151 = vmatpush1.msra.mxu0 0.0
    %152 = vmatprep.subr.mxu0 0.0
    %153 = vmatpush1.msra.mxu0 0.0
    %154 = vmatprep.subr.mxu0 0.0
    %155 = vmatpush1.msra.mxu0 0.0
    %156 = vmatprep.subr.mxu0 0.0
    %157 = vmatpush1.msra.mxu0 0.0
    %158 = vmatprep.subr.mxu0 0.0
    %159 = vmatpush1.msra.mxu0 0.0
    %160 = vmatprep.subr.mxu0 0.0
    %161 = vmatpush1.msra.mxu0 0.0
    %162 = vmatprep.subr.mxu0 0.0
    %163 = vmatpush1.msra.mxu0 0.0
    %164 = vmatprep.subr.mxu0 0.0
    %165 = vmatpush1.msra.mxu0 0.0
    %166 = vmatprep.mubr.f32.mxu0 0.0
    %167 = vmatmul.mubr.f32.gmra.mrb[0].mxu0 %v98
    %v168 = vpop.f32.mrb[0].mxu0
    %v169 = vadd.f32 %v94, %v168
    %v170 = vpop.f32.mrb[0].mxu0
    %171 = vdwg.mxu0
    %172 = vst [vmem:[#allocation7] sm:$0xff] %v169
    %v173 = vsel %vm88, %v87, 0
    %175 = vmatprep.subr.mxu0 0.0
    %176 = vmatpush1.msra.mxu0 %v90
    %177 = vmatprep.subr.mxu0 0.0
    %178 = vmatpush1.msra.mxu0 %v173
    %179 = vmatprep.subr.mxu0 0.0
    %180 = vmatpush1.msra.mxu0 0.0
    %181 = vmatprep.subr.mxu0 0.0
    %182 = vmatpush1.msra.mxu0 0.0
    %183 = vmatprep.subr.mxu0 0.0
    %184 = vmatpush1.msra.mxu0 0.0
    %185 = vmatprep.subr.mxu0 0.0
    %186 = vmatpush1.msra.mxu0 0.0
    %187 = vmatprep.subr.mxu0 0.0
    %188 = vmatpush1.msra.mxu0 0.0
    %189 = vmatprep.subr.mxu0 0.0
    %190 = vmatpush1.msra.mxu0 0.0
    %191 = vmatprep.subr.mxu0 0.0
    %192 = vmatpush1.msra.mxu0 0.0
    %193 = vmatprep.subr.mxu0 0.0
    %194 = vmatpush1.msra.mxu0 0.0
    %195 = vmatprep.subr.mxu0 0.0
    %196 = vmatpush1.msra.mxu0 0.0
    %197 = vmatprep.subr.mxu0 0.0
    %198 = vmatpush1.msra.mxu0 0.0
    %199 = vmatprep.subr.mxu0 0.0
    %200 = vmatpush1.msra.mxu0 0.0
    %201 = vmatprep.subr.mxu0 0.0
    %202 = vmatpush1.msra.mxu0 0.0
    %203 = vmatprep.subr.mxu0 0.0
    %204 = vmatpush1.msra.mxu0 0.0
    %205 = vmatprep.subr.mxu0 0.0
    %206 = vmatpush1.msra.mxu0 0.0
    %207 = vmatprep.subr.mxu0 0.0
    %208 = vmatpush1.msra.mxu0 0.0
    %209 = vmatprep.subr.mxu0 0.0
    %210 = vmatpush1.msra.mxu0 0.0
    %211 = vmatprep.subr.mxu0 0.0
    %212 = vmatpush1.msra.mxu0 0.0
    %213 = vmatprep.subr.mxu0 0.0
    %214 = vmatpush1.msra.mxu0 0.0
    %215 = vmatprep.subr.mxu0 0.0
    %216 = vmatpush1.msra.mxu0 0.0
    %217 = vmatprep.subr.mxu0 0.0
    %218 = vmatpush1.msra.mxu0 0.0
    %219 = vmatprep.subr.mxu0 0.0
    %220 = vmatpush1.msra.mxu0 0.0
    %221 = vmatprep.subr.mxu0 0.0
    %222 = vmatpush1.msra.mxu0 0.0
    %223 = vmatprep.subr.mxu0 0.0
    %224 = vmatpush1.msra.mxu0 0.0
    %225 = vmatprep.subr.mxu0 0.0
    %226 = vmatpush1.msra.mxu0 0.0
    %227 = vmatprep.subr.mxu0 0.0
    %228 = vmatpush1.msra.mxu0 0.0
    %229 = vmatprep.subr.mxu0 0.0
    %230 = vmatpush1.msra.mxu0 0.0
    %231 = vmatprep.subr.mxu0 0.0
    %232 = vmatpush1.msra.mxu0 0.0
    %233 = vmatprep.subr.mxu0 0.0
    %234 = vmatpush1.msra.mxu0 0.0
    %235 = vmatprep.subr.mxu0 0.0
    %236 = vmatpush1.msra.mxu0 0.0
    %237 = vmatprep.subr.mxu0 0.0
    %238 = vmatpush1.msra.mxu0 0.0
    %239 = vmatprep.mubr.f32.mxu0 0.0
    %240 = vmatmul.mubr.f32.gmra.mrb[0].mxu0 %v98
    %v241 = vpop.f32.mrb[0].mxu0
    %v242 = vadd.f32 %v94, %v241
    %v243 = vpop.f32.mrb[0].mxu0
    %244 = vdwg.mxu0
    %s245 = scalar_lea.vmem [#allocation7], 8
    %246 = vst [vmem:[%s245] sm:$0xff] %v242
    // Predicated region
    $region26: #{tpu_custom_call.1} parent=1 // pred_check
      _
    $region27: #{tpu_custom_call.1} parent=1 // pred_check_branch
      %248 = sbr.rel (0) target = $region29
    $region28: #{tpu_custom_call.1} parent=1 // pred_region
      %s250 = ssub.s32 256, 256
      %251 = vsyncadd [#allocation4], %s250
      %s252 = sshll.u32 [#allocation7], 4
      %s253 = int_to_ptr.vmem [resolvable:$true] %s252
      %258 = dma.vmem_to_hbm [thread:$0]  %s253, 256, %s4, [#allocation4], 128, 128, 8
    $region29: #{tpu_custom_call.1} parent=1 // pred_fallthru
      _
    // Predicated region
    $region30: #{tpu_custom_call.1} parent=1 // pred_check
      _
    $region31: #{tpu_custom_call.1} parent=1 // pred_check_branch
      %260 = sbr.rel (0) target = $region33
    $region32: #{tpu_custom_call.1} parent=1 // pred_region
      %261 = dma.done [#allocation4], 256
    $region33: #{tpu_custom_call.1} parent=1 // pred_fallthru
      _
    %262 = vsyncpa [#allocation3], 1
    %263 = vsyncpa [#allocation6], 1
    %264 = vsyncpa [#allocation4], 1

</llo_original>
